<compile_context>
chip_gen: v7x
topology: tpu7x:2x2x1
jax: 0.10.0
libtpu: 0.0.40
codegen_flags: <defaults>
</compile_context>

<pallas_src>
import functools

import numpy as np
import jax
import jax.numpy as jnp
from jax.experimental import pallas as pl
from jax.experimental.pallas import tpu as pltpu

LANE = 128


def _round_up(x, m):
    return ((x + m - 1) // m) * m


def _hardswish(y):
    # HardSwish: relu6(y + 3) / 6 * y   (multiply by reciprocal, not divide)
    return jnp.clip(y + 3.0, 0.0, 6.0) * (1.0 / 6.0) * y


def actor_sac_kernel(state_ref, w1b_ref, w_ref, out_ref, *, sp):
    """One batch tile of the full ActorSAC forward (noise_std == 0).

    state_ref : [Bt, Sp]     batch tile of states (f32), Sp = round_up(state_dim, 8)
    w1b_ref   : [Sp+8, P]    f32 slab: rows [0:state_dim] = W1 (cols [0:mid]);
                             rows Sp..Sp+3 = biases b1, bd1, bd2, bm placed at
                             their shifted output lane ranges.
    w_ref     : [3, P, P]    column-shifted weight slabs (f32 or bf16):
                             0: Wd1 (rows [0:mid],  cols [mid:2*mid])
                             1: Wd2 (rows [0:2mid], cols [2*mid:4*mid])
                             2: Wm  (rows [0:4mid], cols [0:action_dim])
    out_ref   : [Bt, P]      tanh(a_mean); valid data in lanes [:action_dim]
    """
    x = state_ref[...]                          # [Bt, Sp] f32
    w1 = w1b_ref[0:sp, :]                       # [Sp, P]  f32
    bias = w1b_ref[sp:sp + 8, :]                # [8, P]   f32 (rows 0..3 valid)
    mxu_dt = w_ref.dtype

    # net__mid[0:2]: Linear(state_dim, mid) + ReLU  -> nonzero lanes [0:mid].
    x1 = jnp.dot(x, w1, preferred_element_type=jnp.float32) + bias[0:1, :]
    x1 = jnp.maximum(x1, 0.0)

    # DenseNet.dense1: columns pre-shifted to [mid:2*mid]; "concat" = VPU add.
    h1 = _hardswish(
        jnp.dot(x1.astype(mxu_dt), w_ref[0],
                preferred_element_type=jnp.float32) + bias[1:2, :])
    x2 = x1 + h1

    # DenseNet.dense2: columns pre-shifted to [2*mid:4*mid].
    h2 = _hardswish(
        jnp.dot(x2.astype(mxu_dt), w_ref[1],
                preferred_element_type=jnp.float32) + bias[2:3, :])
    x3 = x2 + h2

    # net__mean (columns [0:action_dim]) + tanh.
    a_mean = jnp.dot(x3.astype(mxu_dt), w_ref[2],
                     preferred_element_type=jnp.float32) + bias[3:4, :]
    out_ref[...] = jnp.tanh(a_mean)


def pack_params(params, mxu_dtype=jnp.float32):
    """Fold the DenseNet concats into the weight column layout.

    Returns a 3-slab [3, P, P] column-shifted stack (optionally bf16 for the
    MXU) plus one small f32 [Sp+8, P] slab holding W1 and the 4 biases.
    """
    w1, wd1, wd2, wm = params["w1"], params["wd1"], params["wd2"], params["wm"]
    state_dim, mid = w1.shape
    action_dim = wm.shape[1]
    assert wd1.shape == (mid, mid)
    assert wd2.shape == (2 * mid, 2 * mid)
    assert wm.shape[0] == 4 * mid

    P = _round_up(max(4 * mid, action_dim, LANE), LANE)
    # Column-shift packing requires every shifted output range to fit in P.
    assert 4 * mid <= P and action_dim <= P, "re-derive P for this mid_dim"
    Sp = _round_up(max(state_dim, 8), 8)

    wd1p = jnp.zeros((P, P), jnp.float32).at[:mid, mid:2 * mid].set(wd1)
    wd2p = jnp.zeros((P, P), jnp.float32).at[:2 * mid, 2 * mid:4 * mid].set(wd2)
    wmp = jnp.zeros((P, P), jnp.float32).at[:4 * mid, :action_dim].set(wm)
    w_stack = jnp.stack([wd1p, wd2p, wmp], axis=0).astype(mxu_dtype)  # [3,P,P]

    # W1 + biases share one small f32 slab (biases in spare sublanes).
    w1b = jnp.zeros((Sp + 8, P), jnp.float32)
    w1b = w1b.at[:state_dim, :mid].set(w1)
    w1b = w1b.at[Sp + 0, :mid].set(params["b1"].reshape(-1))
    w1b = w1b.at[Sp + 1, mid:2 * mid].set(params["bd1"].reshape(-1))
    w1b = w1b.at[Sp + 2, 2 * mid:4 * mid].set(params["bd2"].reshape(-1))
    w1b = w1b.at[Sp + 3, :action_dim].set(params["bm"].reshape(-1))

    return {"w": w_stack, "w1b": w1b,
            "state_dim": state_dim, "mid_dim": mid,
            "action_dim": action_dim, "P": P, "Sp": Sp}


def actor_sac_forward(state, packed):
    B, state_dim = state.shape
    assert state_dim == packed["state_dim"]
    P, Sp = packed["P"], packed["Sp"]
    action_dim = packed["action_dim"]
    w_stack, w1b = packed["w"], packed["w1b"]

    # Batch padded to the f32 sublane multiple (8).
    Bp = _round_up(max(B, 8), 8)
    if Bp <= 512:
        # Small batch: a single grid step (no per-step overhead).
        bt = Bp
    else:
        # Large batch: big tiles (HBM roofline), but always >= 2 grid steps so
        # the "parallel" batch axis can shard across v7x's two TensorCores.
        bt = min(1024, _round_up((Bp + 1) // 2, 8))
        Bp = _round_up(Bp, bt)

    if Bp == B and Sp == state_dim and state.dtype == jnp.float32:
        x = state                      # no wrapper pad op at all
    else:
        x = jnp.zeros((Bp, Sp), jnp.float32).at[:B, :state_dim].set(
            state.astype(jnp.float32))

    grid = (Bp // bt,)
    kernel = functools.partial(actor_sac_kernel, sp=Sp)
    out = pl.pallas_call(
        kernel,
        out_shape=jax.ShapeDtypeStruct((Bp, P), jnp.float32),
        grid_spec=pltpu.PrefetchScalarGridSpec(
            num_scalar_prefetch=0,
            grid=grid,
            in_specs=[
                pl.BlockSpec((bt, Sp), lambda i: (i, 0)),       # state tile
                pl.BlockSpec((Sp + 8, P), lambda i: (0, 0)),    # W1 + biases (resident)
                pl.BlockSpec((3, P, P), lambda i: (0, 0, 0)),   # weight stack (resident)
            ],
            out_specs=pl.BlockSpec((bt, P), lambda i: (i, 0)),
        ),
        compiler_params=pltpu.CompilerParams(
            dimension_semantics=("parallel",)),
    )(x, w1b, w_stack)
    return out[:B, :action_dim]


def _orthogonal(key, out_dim, in_dim, std):
    # Mirrors torch.nn.init.orthogonal_ on a [out, in] weight, scaled by std.
    return jax.nn.initializers.orthogonal(scale=std)(key, (out_dim, in_dim),
                                                     jnp.float32)


def init_params(key, state_dim, mid_dim, action_dim):
    k1, k2, k3, k4 = jax.random.split(key, 4)
    bias_const = 1e-6
    # net__mid[0]: default torch init -> deterministic uniform here.
    bound = 1.0 / np.sqrt(state_dim)
    w1 = jax.random.uniform(k1, (mid_dim, state_dim), jnp.float32, -bound, bound)
    b1 = jnp.zeros((1, mid_dim), jnp.float32)
    # DenseNet dense1/dense2: orthogonal(std=1.0), bias 1e-6.
    wd1 = _orthogonal(k2, mid_dim, mid_dim, 1.0)
    bd1 = jnp.full((1, mid_dim), bias_const, jnp.float32)
    wd2 = _orthogonal(k3, 2 * mid_dim, 2 * mid_dim, 1.0)
    bd2 = jnp.full((1, 2 * mid_dim), bias_const, jnp.float32)
    # net__mean: orthogonal(std=0.01), bias 1e-6.
    wm = _orthogonal(k4, action_dim, 4 * mid_dim, 0.01)
    bm = jnp.full((1, action_dim), bias_const, jnp.float32)
    # TODO(synk): net__std_log / the noise_std != 0 sampling path and
    # get__a__log_prob are not reproduced here (unused when noise_std == 0.0).
    return {
        "w1": w1.T, "b1": b1,        # stored [in, out]
        "wd1": wd1.T, "bd1": bd1,
        "wd2": wd2.T, "bd2": bd2,
        "wm": wm.T, "bm": bm,
    }


def reference_forward(state, p):
    x1 = jnp.maximum(state @ p["w1"] + p["b1"], 0.0)
    h1 = _hardswish(x1 @ p["wd1"] + p["bd1"])
    x2 = jnp.concatenate([x1, h1], axis=1)
    h2 = _hardswish(x2 @ p["wd2"] + p["bd2"])
    x3 = jnp.concatenate([x2, h2], axis=1)
    return jnp.tanh(x3 @ p["wm"] + p["bm"])


if __name__ == "__main__":
    key = jax.random.PRNGKey(0)
    k_param, k_state, k_state2 = jax.random.split(key, 3)

    batch, state_dim, mid_dim, action_dim = 8, 16, 32, 8
    params = init_params(k_param, state_dim, mid_dim, action_dim)

    state = jax.random.normal(k_state, (batch, state_dim), jnp.float32)
    state_big = jax.random.normal(k_state2, (1111, state_dim), jnp.float32)
    ref = reference_forward(state, params)
    ref_big = reference_forward(state_big, params)

    # --- f32 path -----------------------------------------------------------
    packed_f32 = pack_params(params, mxu_dtype=jnp.float32)

    # Small batch (single grid step, state passed through unpadded).
    out = jax.block_until_ready(actor_sac_forward(state, packed_f32))
    np.testing.assert_allclose(np.asarray(out), np.asarray(ref),
                               rtol=1e-5, atol=1e-5)

    # Large ragged batch (>=2 grid steps, parallel over tiles / v7x TCs).
    out_big = jax.block_until_ready(actor_sac_forward(state_big, packed_f32))
    np.testing.assert_allclose(np.asarray(out_big), np.asarray(ref_big),
                               rtol=1e-5, atol=1e-5)

    # --- bf16-at-the-MXU path (v6e/v7x throughput; VPU math stays f32) ------
    packed_bf16 = pack_params(params, mxu_dtype=jnp.bfloat16)
    out_bf = jax.block_until_ready(actor_sac_forward(state, packed_bf16))
    np.testing.assert_allclose(np.asarray(out_bf), np.asarray(ref),
                               rtol=5e-2, atol=5e-3)

    print("KERNEL_OK")
</pallas_src>

<mosaic_0001>
module attributes {stable_mosaic.version = 11 : i64} {
  func.func @actor_sac_kernel(%arg0: i32, %arg1: memref<8x16xf32, #tpu.memory_space<vmem>>, %arg2: memref<24x128xf32, #tpu.memory_space<vmem>>, %arg3: memref<3x128x128xf32, #tpu.memory_space<vmem>>, %arg4: memref<8x128xf32, #tpu.memory_space<vmem>>) attributes {dimension_semantics = [#tpu.dimension_semantics<parallel>], iteration_bounds = array<i64: 1>, scalar_prefetch = 0 : i64, scratch_operands = 0 : i64, tpu.core_type = #tpu.core_type<tc>, window_params = [{transform_indices = @transform_0, window_bounds = array<i64: 8, 16>}, {pipeline_mode = #tpu.pipeline_mode<synchronous>, transform_indices = @transform_1, window_bounds = array<i64: 24, 128>}, {pipeline_mode = #tpu.pipeline_mode<synchronous>, transform_indices = @transform_2, window_bounds = array<i64: 3, 128, 128>}, {transform_indices = @transform_3, window_bounds = array<i64: 8, 128>}]} {
    %c0 = arith.constant 0 : index
    %c0_0 = arith.constant 0 : index
    %0 = vector.load %arg1[%c0, %c0_0] : memref<8x16xf32, #tpu.memory_space<vmem>>, vector<8x16xf32>
    %c0_1 = arith.constant 0 : index
    %c0_2 = arith.constant 0 : index
    %1 = vector.load %arg2[%c0_1, %c0_2] : memref<24x128xf32, #tpu.memory_space<vmem>>, vector<16x128xf32>
    %c16 = arith.constant 16 : index
    %c0_3 = arith.constant 0 : index
    %2 = vector.load %arg2[%c16, %c0_3] : memref<24x128xf32, #tpu.memory_space<vmem>>, vector<8x128xf32>
    %cst = arith.constant dense<0.000000e+00> : vector<8x128xf32>
    %3 = tpu.matmul %0, %1, %cst {dimension_numbers = #tpu.dot_dimension_numbers<[1], [0], [0], [1], [0, 0, 1, 1], [], []>} : vector<8x16xf32>, vector<16x128xf32>, vector<8x128xf32> -> vector<8x128xf32>
    %4 = vector.extract_strided_slice %2 {offsets = [0, 0], sizes = [1, 128], strides = [1, 1]} : vector<8x128xf32> to vector<1x128xf32>
    %5 = vector.broadcast %4 : vector<1x128xf32> to vector<8x128xf32>
    %6 = arith.addf %3, %5 : vector<8x128xf32>
    %cst_4 = arith.constant 0.000000e+00 : f32
    %7 = vector.broadcast %cst_4 : f32 to vector<8x128xf32>
    %8 = arith.maximumf %6, %7 : vector<8x128xf32>
    %c0_5 = arith.constant 0 : index
    %c0_6 = arith.constant 0 : index
    %c0_7 = arith.constant 0 : index
    %9 = vector.load %arg3[%c0_5, %c0_6, %c0_7] : memref<3x128x128xf32, #tpu.memory_space<vmem>>, vector<1x128x128xf32>
    %10 = vector.shape_cast %9 : vector<1x128x128xf32> to vector<128x128xf32>
    %cst_8 = arith.constant dense<0.000000e+00> : vector<8x128xf32>
    %11 = tpu.matmul %8, %10, %cst_8 {dimension_numbers = #tpu.dot_dimension_numbers<[1], [0], [0], [1], [0, 0, 1, 1], [], []>} : vector<8x128xf32>, vector<128x128xf32>, vector<8x128xf32> -> vector<8x128xf32>
    %12 = vector.extract_strided_slice %2 {offsets = [1, 0], sizes = [1, 128], strides = [1, 1]} : vector<8x128xf32> to vector<1x128xf32>
    %13 = vector.broadcast %12 : vector<1x128xf32> to vector<8x128xf32>
    %14 = arith.addf %11, %13 : vector<8x128xf32>
    %cst_9 = arith.constant 3.000000e+00 : f32
    %15 = vector.broadcast %cst_9 : f32 to vector<8x128xf32>
    %16 = arith.addf %14, %15 : vector<8x128xf32>
    %cst_10 = arith.constant 0.000000e+00 : f32
    %cst_11 = arith.constant 6.000000e+00 : f32
    %17 = vector.broadcast %cst_10 : f32 to vector<8x128xf32>
    %18 = arith.maximumf %17, %16 : vector<8x128xf32>
    %19 = vector.broadcast %cst_11 : f32 to vector<8x128xf32>
    %20 = arith.minimumf %19, %18 : vector<8x128xf32>
    %cst_12 = arith.constant 0.166666672 : f32
    %21 = vector.broadcast %cst_12 : f32 to vector<8x128xf32>
    %22 = arith.mulf %20, %21 : vector<8x128xf32>
    %23 = arith.mulf %22, %14 : vector<8x128xf32>
    %24 = arith.addf %8, %23 : vector<8x128xf32>
    %c1 = arith.constant 1 : index
    %c0_13 = arith.constant 0 : index
    %c0_14 = arith.constant 0 : index
    %25 = vector.load %arg3[%c1, %c0_13, %c0_14] : memref<3x128x128xf32, #tpu.memory_space<vmem>>, vector<1x128x128xf32>
    %26 = vector.shape_cast %25 : vector<1x128x128xf32> to vector<128x128xf32>
    %cst_15 = arith.constant dense<0.000000e+00> : vector<8x128xf32>
    %27 = tpu.matmul %24, %26, %cst_15 {dimension_numbers = #tpu.dot_dimension_numbers<[1], [0], [0], [1], [0, 0, 1, 1], [], []>} : vector<8x128xf32>, vector<128x128xf32>, vector<8x128xf32> -> vector<8x128xf32>
    %28 = vector.extract_strided_slice %2 {offsets = [2, 0], sizes = [1, 128], strides = [1, 1]} : vector<8x128xf32> to vector<1x128xf32>
    %29 = vector.broadcast %28 : vector<1x128xf32> to vector<8x128xf32>
    %30 = arith.addf %27, %29 : vector<8x128xf32>
    %cst_16 = arith.constant 3.000000e+00 : f32
    %31 = vector.broadcast %cst_16 : f32 to vector<8x128xf32>
    %32 = arith.addf %30, %31 : vector<8x128xf32>
    %cst_17 = arith.constant 0.000000e+00 : f32
    %cst_18 = arith.constant 6.000000e+00 : f32
    %33 = vector.broadcast %cst_17 : f32 to vector<8x128xf32>
    %34 = arith.maximumf %33, %32 : vector<8x128xf32>
    %35 = vector.broadcast %cst_18 : f32 to vector<8x128xf32>
    %36 = arith.minimumf %35, %34 : vector<8x128xf32>
    %cst_19 = arith.constant 0.166666672 : f32
    %37 = vector.broadcast %cst_19 : f32 to vector<8x128xf32>
    %38 = arith.mulf %36, %37 : vector<8x128xf32>
    %39 = arith.mulf %38, %30 : vector<8x128xf32>
    %40 = arith.addf %24, %39 : vector<8x128xf32>
    %c2 = arith.constant 2 : index
    %c0_20 = arith.constant 0 : index
    %c0_21 = arith.constant 0 : index
    %41 = vector.load %arg3[%c2, %c0_20, %c0_21] : memref<3x128x128xf32, #tpu.memory_space<vmem>>, vector<1x128x128xf32>
    %42 = vector.shape_cast %41 : vector<1x128x128xf32> to vector<128x128xf32>
    %cst_22 = arith.constant dense<0.000000e+00> : vector<8x128xf32>
    %43 = tpu.matmul %40, %42, %cst_22 {dimension_numbers = #tpu.dot_dimension_numbers<[1], [0], [0], [1], [0, 0, 1, 1], [], []>} : vector<8x128xf32>, vector<128x128xf32>, vector<8x128xf32> -> vector<8x128xf32>
    %44 = vector.extract_strided_slice %2 {offsets = [3, 0], sizes = [1, 128], strides = [1, 1]} : vector<8x128xf32> to vector<1x128xf32>
    %45 = vector.broadcast %44 : vector<1x128xf32> to vector<8x128xf32>
    %46 = arith.addf %43, %45 : vector<8x128xf32>
    %47 = math.tanh %46 : vector<8x128xf32>
    %c0_23 = arith.constant 0 : index
    %c0_24 = arith.constant 0 : index
    %48 = vector.load %arg4[%c0_23, %c0_24] : memref<8x128xf32, #tpu.memory_space<vmem>>, vector<8x128xf32>
    tpu.vector_store %arg4[%c0_23, %c0_24], %47 {strides = array<i32>} : memref<8x128xf32, #tpu.memory_space<vmem>>, vector<8x128xf32>,
    return
  }
  func.func @transform_0(%arg0: i32) -> (i32, i32) {
    %c0_i32 = arith.constant 0 : i32
    %c0_i32_0 = arith.constant 0 : i32
    return %arg0, %c0_i32 : i32, i32
  }
  func.func @transform_1(%arg0: i32) -> (i32, i32) {
    %c0_i32 = arith.constant 0 : i32
    %c0_i32_0 = arith.constant 0 : i32
    %c0_i32_1 = arith.constant 0 : i32
    return %c0_i32, %c0_i32_0 : i32, i32
  }
  func.func @transform_2(%arg0: i32) -> (i32, i32, i32) {
    %c0_i32 = arith.constant 0 : i32
    %c0_i32_0 = arith.constant 0 : i32
    %c0_i32_1 = arith.constant 0 : i32
    %c0_i32_2 = arith.constant 0 : i32
    return %c0_i32, %c0_i32_0, %c0_i32_1 : i32, i32, i32
  }
  func.func @transform_3(%arg0: i32) -> (i32, i32) {
    %c0_i32 = arith.constant 0 : i32
    %c0_i32_0 = arith.constant 0 : i32
    return %arg0, %c0_i32 : i32, i32
  }
}

</mosaic_0001>

<llo_original>
// kernel: tpu_custom_call.1
$region0: #{tpu_custom_call.1}
  #allocation0 [shape = 'u32[]', space=smem, size = 0x4, offset = 0x4, fixed_abs, tag = 'smem constant byte address 0x4 - core index']
  #allocation1 [shape = 'u32[144,128]{1,0:T(1,128)}', space=vmem, size = 0x12000, scoped, tag = 'internal scratch']
  %s0 = inlined_call_operand.hbm [shape: f32[8,16], index: 0, kind: input, shape index: {}]
  %s1 = inlined_call_operand.hbm [shape: f32[24,128], index: 1, kind: input, shape index: {}]
  %s2 = inlined_call_operand.hbm [shape: f32[3,128,128], index: 2, kind: input, shape index: {}]
  %s3 = inlined_call_operand.hbm [shape: f32[8,128], index: 3, kind: output, shape index: {}]
  %s4 = sld [smem:[#allocation0]]
  $region34: #{tpu_custom_call.1} parent=0
    _
  %s6 = ssub.s32 1, %s4
  %s7 = scalar_select 0, %s6, %s4
  $region1: #{tpu_custom_call.1} parent=0
    #allocation2 [shape = 'u8[4096]{0}', space=vmem, size = 0x1000, scoped, tag = 'input window, operand 0, single buffered']
    #allocation3 [shape = 's32[1]{0}', space=sflag, size = 0x4, scoped, tag = 'scoped memory for tpu_custom_call.1']
    #allocation4 [shape = 's32[1]{0}', space=sflag, size = 0x4, scoped, tag = 'scoped memory for tpu_custom_call.1']
    #allocation5 [shape = 'u8[12288]{0}', space=vmem, size = 0x3000, scoped, tag = 'input window, operand 1, single buffered']
    #allocation6 [shape = 's32[1]{0}', space=sflag, size = 0x4, scoped, tag = 'scoped memory for tpu_custom_call.1']
    #allocation7 [shape = 'u8[196608]{0}', space=vmem, size = 0x30000, scoped, tag = 'input window, operand 2, single buffered']
    #allocation8 [shape = 'u8[4096]{0}', space=vmem, size = 0x1000, scoped, tag = 'output window, operand 0, single buffered']
    %8 = vsyncpa [#allocation3], 0
    %9 = vsyncpa [#allocation6], 0
    %10 = vsyncpa [#allocation4], 0
    // Predicated region
    $region2: #{tpu_custom_call.1} parent=1 // pred_check
      _
    $region3: #{tpu_custom_call.1} parent=1 // pred_check_branch
      %12 = sbr.rel (0) target = $region5
    $region4: #{tpu_custom_call.1} parent=1 // pred_region
      %s14 = ssub.s32 128, 128
      %15 = vsyncadd [#allocation3], %s14
      %s17 = sshll.u32 [#allocation2], 4
      %s18 = int_to_ptr.vmem [resolvable:$true] %s17
      %20 = dma.hbm_to_vmem [thread:$0]  %s0, 128, %s18, [#allocation3]
    $region5: #{tpu_custom_call.1} parent=1 // pred_fallthru
      _
    // Predicated region
    $region6: #{tpu_custom_call.1} parent=1 // pred_check
      _
    $region7: #{tpu_custom_call.1} parent=1 // pred_check_branch
      %22 = sbr.rel (0) target = $region9
    $region8: #{tpu_custom_call.1} parent=1 // pred_region
      %s24 = ssub.s32 384, 384
      %25 = vsyncadd [#allocation6], %s24
      %s26 = sshll.u32 [#allocation5], 4
      %s27 = int_to_ptr.vmem [resolvable:$true] %s26
      %32 = dma.hbm_to_vmem [thread:$0]  %s1, 384, %s27, [#allocation6], 128, 128, 8
    $region9: #{tpu_custom_call.1} parent=1 // pred_fallthru
      _
    // Predicated region
    $region10: #{tpu_custom_call.1} parent=1 // pred_check
      _
    $region11: #{tpu_custom_call.1} parent=1 // pred_check_branch
      %34 = sbr.rel (0) target = $region13
    $region12: #{tpu_custom_call.1} parent=1 // pred_region
      %s36 = ssub.s32 6144, 6144
      %37 = vsyncadd [#allocation6], %s36
      %s38 = sshll.u32 [#allocation7], 4
      %s39 = int_to_ptr.vmem [resolvable:$true] %s38
      %44 = dma.hbm_to_vmem [thread:$0]  %s2, 6144, %s39, [#allocation6], 128, 128, 8
    $region13: #{tpu_custom_call.1} parent=1 // pred_fallthru
      _
    // Predicated region
    $region14: #{tpu_custom_call.1} parent=1 // pred_check
      _
    $region15: #{tpu_custom_call.1} parent=1 // pred_check_branch
      %46 = sbr.rel (0) target = $region17
    $region16: #{tpu_custom_call.1} parent=1 // pred_region
      %47 = dma.done [#allocation3], 128
    $region17: #{tpu_custom_call.1} parent=1 // pred_fallthru
      _
    // Predicated region
    $region18: #{tpu_custom_call.1} parent=1 // pred_check
      _
    $region19: #{tpu_custom_call.1} parent=1 // pred_check_branch
      %49 = sbr.rel (0) target = $region21
    $region20: #{tpu_custom_call.1} parent=1 // pred_region
      %50 = dma.done [#allocation6], 384
    $region21: #{tpu_custom_call.1} parent=1 // pred_fallthru
      _
    // Predicated region
    $region22: #{tpu_custom_call.1} parent=1 // pred_check
      _
    $region23: #{tpu_custom_call.1} parent=1 // pred_check_branch
      %52 = sbr.rel (0) target = $region25
    $region24: #{tpu_custom_call.1} parent=1 // pred_region
      %53 = dma.done [#allocation6], 6144
    $region25: #{tpu_custom_call.1} parent=1 // pred_fallthru
      _
    %v54 = vld [vmem:[#allocation2] sm:$0xff]
    %v55 = vld [vmem:[#allocation5] sm:$0xff]
    %v56 = vld [vmem:[#allocation5 + $0x8] sm:$0xff]
    %v57 = vld [vmem:[#allocation5 + $0x10] sm:$0xff]
    %v58 = vlaneseq
    %v59 = vshrl.u32 %v58, 7
    %v60 = vsub.s32 0, %v59
    %v61 = vrot.slane %v57, %v60
    %vm62 = vcmask 130048
    %v64 = vsel %vm62, %v54, 0
    %66 = vmatprep.subr.mxu0 0.0
    %67 = vmatpush1.msra.mxu0 %v55
    %68 = vmatprep.subr.mxu0 0.0
    %69 = vmatpush1.msra.mxu0 %v56
    %70 = vmatprep.subr.mxu0 0.0
    %71 = vmatpush1.msra.mxu0 0.0
    %72 = vmatprep.subr.mxu0 0.0
    %73 = vmatpush1.msra.mxu0 0.0
    %74 = vmatprep.subr.mxu0 0.0
    %75 = vmatpush1.msra.mxu0 0.0
    %76 = vmatprep.subr.mxu0 0.0
    %77 = vmatpush1.msra.mxu0 0.0
    %78 = vmatprep.subr.mxu0 0.0
    %79 = vmatpush1.msra.mxu0 0.0
    %80 = vmatprep.subr.mxu0 0.0
    %81 = vmatpush1.msra.mxu0 0.0
    %82 = vmatprep.subr.mxu0 0.0
    %83 = vmatpush1.msra.mxu0 0.0
    %84 = vmatprep.subr.mxu0 0.0
    %85 = vmatpush1.msra.mxu0 0.0
    %86 = vmatprep.subr.mxu0 0.0
    %87 = vmatpush1.msra.mxu0 0.0
    %88 = vmatprep.subr.mxu0 0.0
    %89 = vmatpush1.msra.mxu0 0.0
    %90 = vmatprep.subr.mxu0 0.0
    %91 = vmatpush1.msra.mxu0 0.0
    %92 = vmatprep.subr.mxu0 0.0
    %93 = vmatpush1.msra.mxu0 0.0
    %94 = vmatprep.subr.mxu0 0.0
    %95 = vmatpush1.msra.mxu0 0.0
    %96 = vmatprep.subr.mxu0 0.0
    %97 = vmatpush1.msra.mxu0 0.0
    %98 = vmatprep.subr.mxu0 0.0
    %99 = vmatpush1.msra.mxu0 0.0
    %100 = vmatprep.subr.mxu0 0.0
    %101 = vmatpush1.msra.mxu0 0.0
    %102 = vmatprep.subr.mxu0 0.0
    %103 = vmatpush1.msra.mxu0 0.0
    %104 = vmatprep.subr.mxu0 0.0
    %105 = vmatpush1.msra.mxu0 0.0
    %106 = vmatprep.subr.mxu0 0.0
    %107 = vmatpush1.msra.mxu0 0.0
    %108 = vmatprep.subr.mxu0 0.0
    %109 = vmatpush1.msra.mxu0 0.0
    %110 = vmatprep.subr.mxu0 0.0
    %111 = vmatpush1.msra.mxu0 0.0
    %112 = vmatprep.subr.mxu0 0.0
    %113 = vmatpush1.msra.mxu0 0.0
    %114 = vmatprep.subr.mxu0 0.0
    %115 = vmatpush1.msra.mxu0 0.0
    %116 = vmatprep.subr.mxu0 0.0
    %117 = vmatpush1.msra.mxu0 0.0
    %118 = vmatprep.subr.mxu0 0.0
    %119 = vmatpush1.msra.mxu0 0.0
    %120 = vmatprep.subr.mxu0 0.0
    %121 = vmatpush1.msra.mxu0 0.0
    %122 = vmatprep.subr.mxu0 0.0
    %123 = vmatpush1.msra.mxu0 0.0
    %124 = vmatprep.subr.mxu0 0.0
    %125 = vmatpush1.msra.mxu0 0.0
    %126 = vmatprep.subr.mxu0 0.0
    %127 = vmatpush1.msra.mxu0 0.0
    %128 = vmatprep.subr.mxu0 0.0
    %129 = vmatpush1.msra.mxu0 0.0
    %130 = vmatprep.mubr.f32.mxu0 0.0
    %131 = vmatmul.mubr.f32.gmra.mrb[0].mxu0 %v64
    %v132 = vpop.f32.mrb[0].mxu0
    %v133 = vadd.f32 %v61, %v132
    %v134 = vpop.f32.mrb[0].mxu0
    %135 = vdwg.mxu0
    %v136 = vmax.f32 %v133, 0.0
    %v137 = vld [vmem:[#allocation7] sm:$0xff]
    %v138 = vld [vmem:[#allocation7 + $0x8] sm:$0xff]
    %v139 = vld [vmem:[#allocation7 + $0x10] sm:$0xff]
    %v140 = vld [vmem:[#allocation7 + $0x18] sm:$0xff]
    %v141 = vld [vmem:[#allocation7 + $0x20] sm:$0xff]
    %v142 = vld [vmem:[#allocation7 + $0x28] sm:$0xff]
    %v143 = vld [vmem:[#allocation7 + $0x30] sm:$0xff]
    %v144 = vld [vmem:[#allocation7 + $0x38] sm:$0xff]
    %v145 = vld [vmem:[#allocation7 + $0x40] sm:$0xff]
    %v146 = vld [vmem:[#allocation7 + $0x48] sm:$0xff]
    %v147 = vld [vmem:[#allocation7 + $0x50] sm:$0xff]
    %v148 = vld [vmem:[#allocation7 + $0x58] sm:$0xff]
    %v149 = vld [vmem:[#allocation7 + $0x60] sm:$0xff]
    %v150 = vld [vmem:[#allocation7 + $0x68] sm:$0xff]
    %v151 = vld [vmem:[#allocation7 + $0x70] sm:$0xff]
    %v152 = vld [vmem:[#allocation7 + $0x78] sm:$0xff]
    %v153 = vlaneseq
    %v154 = vshrl.u32 %v153, 7
    %v155 = vsub.s32 1, %v154
    %v156 = vrot.slane %v57, %v155
    %157 = vmatprep.subr.mxu0 0.0
    %158 = vmatpush1.msra.mxu0 %v137
    %159 = vmatprep.subr.mxu0 0.0
    %160 = vmatpush1.msra.mxu0 %v138
    %161 = vmatprep.subr.mxu0 0.0
    %162 = vmatpush1.msra.mxu0 %v139
    %163 = vmatprep.subr.mxu0 0.0
    %164 = vmatpush1.msra.mxu0 %v140
    %165 = vmatprep.subr.mxu0 0.0
    %166 = vmatpush1.msra.mxu0 %v141
    %167 = vmatprep.subr.mxu0 0.0
    %168 = vmatpush1.msra.mxu0 %v142
    %169 = vmatprep.subr.mxu0 0.0
    %170 = vmatpush1.msra.mxu0 %v143
    %171 = vmatprep.subr.mxu0 0.0
    %172 = vmatpush1.msra.mxu0 %v144
    %173 = vmatprep.subr.mxu0 0.0
    %174 = vmatpush1.msra.mxu0 %v145
    %175 = vmatprep.subr.mxu0 0.0
    %176 = vmatpush1.msra.mxu0 %v146
    %177 = vmatprep.subr.mxu0 0.0
    %178 = vmatpush1.msra.mxu0 %v147
    %179 = vmatprep.subr.mxu0 0.0
    %180 = vmatpush1.msra.mxu0 %v148
    %181 = vmatprep.subr.mxu0 0.0
    %182 = vmatpush1.msra.mxu0 %v149
    %183 = vmatprep.subr.mxu0 0.0
    %184 = vmatpush1.msra.mxu0 %v150
    %185 = vmatprep.subr.mxu0 0.0
    %186 = vmatpush1.msra.mxu0 %v151
    %187 = vmatprep.subr.mxu0 0.0
    %188 = vmatpush1.msra.mxu0 %v152
    %189 = vmatprep.subr.mxu0 0.0
    %190 = vmatpush1.msra.mxu0 0.0
    %191 = vmatprep.subr.mxu0 0.0
    %192 = vmatpush1.msra.mxu0 0.0
    %193 = vmatprep.subr.mxu0 0.0
    %194 = vmatpush1.msra.mxu0 0.0
    %195 = vmatprep.subr.mxu0 0.0
    %196 = vmatpush1.msra.mxu0 0.0
    %197 = vmatprep.subr.mxu0 0.0
    %198 = vmatpush1.msra.mxu0 0.0
    %199 = vmatprep.subr.mxu0 0.0
    %200 = vmatpush1.msra.mxu0 0.0
    %201 = vmatprep.subr.mxu0 0.0
    %202 = vmatpush1.msra.mxu0 0.0
    %203 = vmatprep.subr.mxu0 0.0
    %204 = vmatpush1.msra.mxu0 0.0
    %205 = vmatprep.subr.mxu0 0.0
    %206 = vmatpush1.msra.mxu0 0.0
    %207 = vmatprep.subr.mxu0 0.0
    %208 = vmatpush1.msra.mxu0 0.0
    %209 = vmatprep.subr.mxu0 0.0
    %210 = vmatpush1.msra.mxu0 0.0
    %211 = vmatprep.subr.mxu0 0.0
    %212 = vmatpush1.msra.mxu0 0.0
    %213 = vmatprep.subr.mxu0 0.0
    %214 = vmatpush1.msra.mxu0 0.0
    %215 = vmatprep.subr.mxu0 0.0
    %216 = vmatpush1.msra.mxu0 0.0
    %217 = vmatprep.subr.mxu0 0.0
    %218 = vmatpush1.msra.mxu0 0.0
    %219 = vmatprep.subr.mxu0 0.0
    %220 = vmatpush1.msra.mxu0 0.0
    %221 = vmatprep.mubr.f32.mxu0 0.0
    %222 = vmatmul.mubr.f32.gmra.mrb[0].mxu0 %v136
    %v223 = vpop.f32.mrb[0].mxu0
    %v224 = vadd.f32 %v156, %v223
    %v225 = vpop.f32.mrb[0].mxu0
    %226 = vdwg.mxu0
    %v227 = vadd.f32 %v224, 3.0
    %v228 = vmax.f32 %v227, 0.0
    %v229 = vmin.f32 %v228, 6.0
    %v230 = vmul.f32 %v229, 0.16666667
    %v231 = vmul.f32 %v230, %v224
    %v232 = vadd.f32 %v136, %v231
    %s233 = scalar_lea.vmem [#allocation7], 128
    %v234 = vld [vmem:[%s233] sm:$0xff]
    %v235 = vld [vmem:[%s233 + $0x8] sm:$0xff]
    %v236 = vld [vmem:[%s233 + $0x10] sm:$0xff]
    %v237 = vld [vmem:[%s233 + $0x18] sm:$0xff]
    %v238 = vld [vmem:[%s233 + $0x20] sm:$0xff]
    %v239 = vld [vmem:[%s233 + $0x28] sm:$0xff]
    %v240 = vld [vmem:[%s233 + $0x30] sm:$0xff]
    %v241 = vld [vmem:[%s233 + $0x38] sm:$0xff]
    %v242 = vld [vmem:[%s233 + $0x40] sm:$0xff]
    %v243 = vld [vmem:[%s233 + $0x48] sm:$0xff]
    %v244 = vld [vmem:[%s233 + $0x50] sm:$0xff]
    %v245 = vld [vmem:[%s233 + $0x58] sm:$0xff]
    %v246 = vld [vmem:[%s233 + $0x60] sm:$0xff]
    %v247 = vld [vmem:[%s233 + $0x68] sm:$0xff]
    %v248 = vld [vmem:[%s233 + $0x70] sm:$0xff]
    %v249 = vld [vmem:[%s233 + $0x78] sm:$0xff]
    %v250 = vlaneseq
    %v251 = vshrl.u32 %v250, 7
    %v252 = vsub.s32 2, %v251
    %v253 = vrot.slane %v57, %v252
    %254 = vmatprep.subr.mxu0 0.0
    %255 = vmatpush1.msra.mxu0 %v234
    %256 = vmatprep.subr.mxu0 0.0
    %257 = vmatpush1.msra.mxu0 %v235
    %258 = vmatprep.subr.mxu0 0.0
    %259 = vmatpush1.msra.mxu0 %v236
    %260 = vmatprep.subr.mxu0 0.0
    %261 = vmatpush1.msra.mxu0 %v237
    %262 = vmatprep.subr.mxu0 0.0
    %263 = vmatpush1.msra.mxu0 %v238
    %264 = vmatprep.subr.mxu0 0.0
    %265 = vmatpush1.msra.mxu0 %v239
    %266 = vmatprep.subr.mxu0 0.0
    %267 = vmatpush1.msra.mxu0 %v240
    %268 = vmatprep.subr.mxu0 0.0
    %269 = vmatpush1.msra.mxu0 %v241
    %270 = vmatprep.subr.mxu0 0.0
    %271 = vmatpush1.msra.mxu0 %v242
    %272 = vmatprep.subr.mxu0 0.0
    %273 = vmatpush1.msra.mxu0 %v243
    %274 = vmatprep.subr.mxu0 0.0
    %275 = vmatpush1.msra.mxu0 %v244
    %276 = vmatprep.subr.mxu0 0.0
    %277 = vmatpush1.msra.mxu0 %v245
    %278 = vmatprep.subr.mxu0 0.0
    %279 = vmatpush1.msra.mxu0 %v246
    %280 = vmatprep.subr.mxu0 0.0
    %281 = vmatpush1.msra.mxu0 %v247
    %282 = vmatprep.subr.mxu0 0.0
    %283 = vmatpush1.msra.mxu0 %v248
    %284 = vmatprep.subr.mxu0 0.0
    %285 = vmatpush1.msra.mxu0 %v249
    %286 = vmatprep.subr.mxu0 0.0
    %287 = vmatpush1.msra.mxu0 0.0
    %288 = vmatprep.subr.mxu0 0.0
    %289 = vmatpush1.msra.mxu0 0.0
    %290 = vmatprep.subr.mxu0 0.0
    %291 = vmatpush1.msra.mxu0 0.0
    %292 = vmatprep.subr.mxu0 0.0
    %293 = vmatpush1.msra.mxu0 0.0
    %294 = vmatprep.subr.mxu0 0.0
    %295 = vmatpush1.msra.mxu0 0.0
    %296 = vmatprep.subr.mxu0 0.0
    %297 = vmatpush1.msra.mxu0 0.0
    %298 = vmatprep.subr.mxu0 0.0
    %299 = vmatpush1.msra.mxu0 0.0
    %300 = vmatprep.subr.mxu0 0.0
    %301 = vmatpush1.msra.mxu0 0.0
    %302 = vmatprep.subr.mxu0 0.0
    %303 = vmatpush1.msra.mxu0 0.0
    %304 = vmatprep.subr.mxu0 0.0
    %305 = vmatpush1.msra.mxu0 0.0
    %306 = vmatprep.subr.mxu0 0.0
    %307 = vmatpush1.msra.mxu0 0.0
    %308 = vmatprep.subr.mxu0 0.0
    %309 = vmatpush1.msra.mxu0 0.0
    %310 = vmatprep.subr.mxu0 0.0
    %311 = vmatpush1.msra.mxu0 0.0
    %312 = vmatprep.subr.mxu0 0.0
    %313 = vmatpush1.msra.mxu0 0.0
    %314 = vmatprep.subr.mxu0 0.0
    %315 = vmatpush1.msra.mxu0 0.0
    %316 = vmatprep.subr.mxu0 0.0
    %317 = vmatpush1.msra.mxu0 0.0
    %318 = vmatprep.mubr.f32.mxu0 0.0
    %319 = vmatmul.mubr.f32.gmra.mrb[0].mxu0 %v232
    %v320 = vpop.f32.mrb[0].mxu0
    %v321 = vadd.f32 %v253, %v320
    %v322 = vpop.f32.mrb[0].mxu0
    %323 = vdwg.mxu0
    %v324 = vadd.f32 %v321, 3.0
    %v325 = vmax.f32 %v324, 0.0
    %v326 = vmin.f32 %v325, 6.0
    %v327 = vmul.f32 %v326, 0.16666667
    %v328 = vmul.f32 %v327, %v321
    %v329 = vadd.f32 %v232, %v328
    %s330 = scalar_lea.vmem [#allocation7], 256
    %v331 = vld [vmem:[%s330] sm:$0xff]
    %v332 = vld [vmem:[%s330 + $0x8] sm:$0xff]
    %v333 = vld [vmem:[%s330 + $0x10] sm:$0xff]
    %v334 = vld [vmem:[%s330 + $0x18] sm:$0xff]
    %v335 = vld [vmem:[%s330 + $0x20] sm:$0xff]
    %v336 = vld [vmem:[%s330 + $0x28] sm:$0xff]
    %v337 = vld [vmem:[%s330 + $0x30] sm:$0xff]
    %v338 = vld [vmem:[%s330 + $0x38] sm:$0xff]
    %v339 = vld [vmem:[%s330 + $0x40] sm:$0xff]
    %v340 = vld [vmem:[%s330 + $0x48] sm:$0xff]
    %v341 = vld [vmem:[%s330 + $0x50] sm:$0xff]
    %v342 = vld [vmem:[%s330 + $0x58] sm:$0xff]
    %v343 = vld [vmem:[%s330 + $0x60] sm:$0xff]
    %v344 = vld [vmem:[%s330 + $0x68] sm:$0xff]
    %v345 = vld [vmem:[%s330 + $0x70] sm:$0xff]
    %v346 = vld [vmem:[%s330 + $0x78] sm:$0xff]
    %v347 = vlaneseq
    %v348 = vshrl.u32 %v347, 7
    %v349 = vsub.s32 3, %v348
    %v350 = vrot.slane %v57, %v349
    %351 = vmatprep.subr.mxu0 0.0
    %352 = vmatpush1.msra.mxu0 %v331
    %353 = vmatprep.subr.mxu0 0.0
    %354 = vmatpush1.msra.mxu0 %v332
    %355 = vmatprep.subr.mxu0 0.0
    %356 = vmatpush1.msra.mxu0 %v333
    %357 = vmatprep.subr.mxu0 0.0
    %358 = vmatpush1.msra.mxu0 %v334
    %359 = vmatprep.subr.mxu0 0.0
    %360 = vmatpush1.msra.mxu0 %v335
    %361 = vmatprep.subr.mxu0 0.0
    %362 = vmatpush1.msra.mxu0 %v336
    %363 = vmatprep.subr.mxu0 0.0
    %364 = vmatpush1.msra.mxu0 %v337
    %365 = vmatprep.subr.mxu0 0.0
    %366 = vmatpush1.msra.mxu0 %v338
    %367 = vmatprep.subr.mxu0 0.0
    %368 = vmatpush1.msra.mxu0 %v339
    %369 = vmatprep.subr.mxu0 0.0
    %370 = vmatpush1.msra.mxu0 %v340
    %371 = vmatprep.subr.mxu0 0.0
    %372 = vmatpush1.msra.mxu0 %v341
    %373 = vmatprep.subr.mxu0 0.0
    %374 = vmatpush1.msra.mxu0 %v342
    %375 = vmatprep.subr.mxu0 0.0
    %376 = vmatpush1.msra.mxu0 %v343
    %377 = vmatprep.subr.mxu0 0.0
    %378 = vmatpush1.msra.mxu0 %v344
    %379 = vmatprep.subr.mxu0 0.0
    %380 = vmatpush1.msra.mxu0 %v345
    %381 = vmatprep.subr.mxu0 0.0
    %382 = vmatpush1.msra.mxu0 %v346
    %383 = vmatprep.subr.mxu0 0.0
    %384 = vmatpush1.msra.mxu0 0.0
    %385 = vmatprep.subr.mxu0 0.0
    %386 = vmatpush1.msra.mxu0 0.0
    %387 = vmatprep.subr.mxu0 0.0
    %388 = vmatpush1.msra.mxu0 0.0
    %389 = vmatprep.subr.mxu0 0.0
    %390 = vmatpush1.msra.mxu0 0.0
    %391 = vmatprep.subr.mxu0 0.0
    %392 = vmatpush1.msra.mxu0 0.0
    %393 = vmatprep.subr.mxu0 0.0
    %394 = vmatpush1.msra.mxu0 0.0
    %395 = vmatprep.subr.mxu0 0.0
    %396 = vmatpush1.msra.mxu0 0.0
    %397 = vmatprep.subr.mxu0 0.0
    %398 = vmatpush1.msra.mxu0 0.0
    %399 = vmatprep.subr.mxu0 0.0
    %400 = vmatpush1.msra.mxu0 0.0
    %401 = vmatprep.subr.mxu0 0.0
    %402 = vmatpush1.msra.mxu0 0.0
    %403 = vmatprep.subr.mxu0 0.0
    %404 = vmatpush1.msra.mxu0 0.0
    %405 = vmatprep.subr.mxu0 0.0
    %406 = vmatpush1.msra.mxu0 0.0
    %407 = vmatprep.subr.mxu0 0.0
    %408 = vmatpush1.msra.mxu0 0.0
    %409 = vmatprep.subr.mxu0 0.0
    %410 = vmatpush1.msra.mxu0 0.0
    %411 = vmatprep.subr.mxu0 0.0
    %412 = vmatpush1.msra.mxu0 0.0
    %413 = vmatprep.subr.mxu0 0.0
    %414 = vmatpush1.msra.mxu0 0.0
    %415 = vmatprep.mubr.f32.mxu0 0.0
    %416 = vmatmul.mubr.f32.gmra.mrb[0].mxu0 %v329
    %v417 = vpop.f32.mrb[0].mxu0
    %v418 = vadd.f32 %v350, %v417
    %v419 = vpop.f32.mrb[0].mxu0
    %420 = vdwg.mxu0
    %v421 = vtanh.pop %v418
    %422 = vst [vmem:[#allocation8] sm:$0xff] %v421
    // Predicated region
    $region26: #{tpu_custom_call.1} parent=1 // pred_check
      _
    $region27: #{tpu_custom_call.1} parent=1 // pred_check_branch
      %424 = sbr.rel (0) target = $region29
    $region28: #{tpu_custom_call.1} parent=1 // pred_region
      %s426 = ssub.s32 128, 128
      %427 = vsyncadd [#allocation4], %s426
      %s429 = sshll.u32 [#allocation8], 4
      %s430 = int_to_ptr.vmem [resolvable:$true] %s429
      %432 = dma.vmem_to_hbm [thread:$0]  %s430, 128, %s3, [#allocation4]
    $region29: #{tpu_custom_call.1} parent=1 // pred_fallthru
      _
    // Predicated region
    $region30: #{tpu_custom_call.1} parent=1 // pred_check
      _
    $region31: #{tpu_custom_call.1} parent=1 // pred_check_branch
      %434 = sbr.rel (0) target = $region33
    $region32: #{tpu_custom_call.1} parent=1 // pred_region
      %435 = dma.done [#allocation4], 128
    $region33: #{tpu_custom_call.1} parent=1 // pred_fallthru
      _
    %436 = vsyncpa [#allocation3], 1
    %437 = vsyncpa [#allocation6], 1
    %438 = vsyncpa [#allocation4], 1

</llo_original>
